<compile_context>
chip_gen: v5e
topology: v5e:2x2
jax: 0.10.0
libtpu: 0.0.40
codegen_flags: <defaults>
</compile_context>

<pallas_src>
import jax
import jax.numpy as jnp
from jax.experimental import pallas as pl
from jax.experimental.pallas import tpu as pltpu

_LANE = 128


def _round_up(x, m):
    return ((x + m - 1) // m) * m


# ---------------------------------------------------------------------------
# Fused Pallas kernel: one grid step per GCN layer.
#   o_ref (f32, constant block index) doubles as the carried feature state;
#   it is written back to HBM only once, after the last layer.
# ---------------------------------------------------------------------------
def _fused_gcn_kernel(a_ref, x0_ref, w_ref, b_ref, o_ref):
    layer = pl.program_id(0)

    @pl.when(layer == 0)
    def _init():
        o_ref[...] = x0_ref[...]

    # X @ W on the MXU: bf16 operands, f32 accumulation.
    x_bf16 = o_ref[...].astype(jnp.bfloat16)
    xw = jnp.dot(x_bf16, w_ref[...], preferred_element_type=jnp.float32)
    # Neighbor aggregation A_hat @ (XW), then bias + ReLU on the VPU (f32).
    agg = jnp.dot(a_ref[...], xw.astype(jnp.bfloat16),
                  preferred_element_type=jnp.float32)
    o_ref[...] = jnp.maximum(agg + b_ref[...], 0.0)


def _fused_gcn_layers(a_pad, x_pad, w_stack, b_stack):
    n_pad = a_pad.shape[0]
    num_layers, f_pad, _ = w_stack.shape

    # Explicit VMEM budget: (double-buffered) blocks + headroom, capped so the
    # request stays portable down to v7x's smaller VMEM.
    block_bytes = (a_pad.size * 2          # A_hat  bf16 (resident)
                   + x_pad.size * 4        # X0     f32  (resident)
                   + f_pad * f_pad * 2     # W_l    bf16 (streamed)
                   + f_pad * 4             # b_l    f32  (streamed)
                   + n_pad * f_pad * 4)    # output f32  (resident)
    vmem_limit = int(min(max(2 * block_bytes + (2 << 20), 8 << 20), 96 << 20))

    return pl.pallas_call(
        _fused_gcn_kernel,
        out_shape=jax.ShapeDtypeStruct((n_pad, f_pad), jnp.float32),
        grid=(num_layers,),
        in_specs=[
            pl.BlockSpec((n_pad, n_pad), lambda l: (0, 0)),           # A_hat
            pl.BlockSpec((n_pad, f_pad), lambda l: (0, 0)),           # X0
            pl.BlockSpec((None, f_pad, f_pad), lambda l: (l, 0, 0)),  # W_l
            pl.BlockSpec((None, 1, f_pad), lambda l: (l, 0, 0)),      # b_l
        ],
        out_specs=pl.BlockSpec((n_pad, f_pad), lambda l: (0, 0)),
        compiler_params=pltpu.CompilerParams(
            # Layer axis carries a data dependency -> sequential.
            dimension_semantics=("arbitrary",),
            vmem_limit_bytes=vmem_limit,
        ),
    )(a_pad, x_pad, w_stack, b_stack)


# ---------------------------------------------------------------------------
# Glue: dense GCN-normalized adjacency from the edge list (plain JAX).
# ---------------------------------------------------------------------------
def build_normalized_adjacency(edges, num_nodes):
    src = edges[0]
    dst = edges[1]
    a = jnp.zeros((num_nodes, num_nodes), dtype=jnp.float32)
    # scatter-ADD so duplicate edges accumulate weight (matches gcn_norm);
    # message flows source -> target  =>  A[target, source] += 1
    a = a.at[dst, src].add(1.0)
    # add_remaining_self_loops: only nodes without an existing self loop.
    idx = jnp.arange(num_nodes)
    diag = a[idx, idx]
    a = a.at[idx, idx].add(jnp.where(diag == 0.0, 1.0, 0.0))
    deg = jnp.sum(a, axis=1)
    d_inv_sqrt = jnp.where(deg > 0.0, 1.0 / jnp.sqrt(deg), 0.0)
    return d_inv_sqrt[:, None] * a * d_inv_sqrt[None, :]


# ---------------------------------------------------------------------------
# Module: Basic_GCN_Layers
# ---------------------------------------------------------------------------
def init_params(key, node_feature_num, gcn_filters):
    """Glorot-uniform weights, zero biases (GCNConv defaults)."""
    dims = [node_feature_num] + list(gcn_filters)
    params = []
    for i in range(len(gcn_filters)):
        f_in, f_out = dims[i], dims[i + 1]
        key, sub = jax.random.split(key)
        limit = (6.0 / (f_in + f_out)) ** 0.5
        w = jax.random.uniform(
            sub, (f_in, f_out), dtype=jnp.float32, minval=-limit, maxval=limit
        )
        b = jnp.zeros((1, f_out), dtype=jnp.float32)
        params.append((w, b))
    return params


@jax.jit
def basic_gcn_layers_forward(params, features, edges):
    """Forward pass of Basic_GCN_Layers: for each layer, relu(GCNConv(x, edges))."""
    n, f_in = features.shape
    num_layers = len(params)
    out_dims = [w.shape[1] for (w, _) in params]

    # Pad node and feature dims to lane-dense 128 multiples (zeros stay zero
    # through every layer, so the padding never contaminates real outputs).
    f_pad = _round_up(max([f_in] + out_dims), _LANE)
    n_pad = _round_up(n, _LANE)

    a_norm = build_normalized_adjacency(edges, n)

    a_pad = jnp.zeros((n_pad, n_pad), jnp.bfloat16)
    a_pad = a_pad.at[:n, :n].set(a_norm.astype(jnp.bfloat16))
    x_pad = jnp.zeros((n_pad, f_pad), jnp.float32)
    x_pad = x_pad.at[:n, :f_in].set(features.astype(jnp.float32))

    w_stack = jnp.zeros((num_layers, f_pad, f_pad), jnp.bfloat16)
    b_stack = jnp.zeros((num_layers, 1, f_pad), jnp.float32)
    for i, (w, b) in enumerate(params):
        fi, fo = w.shape
        w_stack = w_stack.at[i, :fi, :fo].set(w.astype(jnp.bfloat16))
        b_stack = b_stack.at[i, 0, :fo].set(b.reshape(-1).astype(jnp.float32))

    out_pad = _fused_gcn_layers(a_pad, x_pad, w_stack, b_stack)
    return out_pad[:n, :out_dims[-1]]


def _reference_forward(params, features, edges):
    """Pure-JAX f32 reference for correctness checking."""
    a_norm = build_normalized_adjacency(edges, features.shape[0])
    x = features.astype(jnp.float32)
    for w, b in params:
        x = jnp.maximum(a_norm @ (x @ w) + b, 0.0)
    return x


if __name__ == "__main__":
    key = jax.random.PRNGKey(0)

    # Small synthetic graph consistent with the module's forward signature.
    num_nodes = 16
    node_feature_num = 8
    gcn_filters = [32, 16]
    num_edges = 40

    key, k_feat, k_edges, k_params = jax.random.split(key, 4)
    features = jax.random.normal(
        k_feat, (num_nodes, node_feature_num), dtype=jnp.float32
    )
    edges = jax.random.randint(
        k_edges, (2, num_edges), minval=0, maxval=num_nodes, dtype=jnp.int32
    )
    params = init_params(k_params, node_feature_num, gcn_filters)

    out = basic_gcn_layers_forward(params, features, edges)
    out = jax.block_until_ready(out)

    assert out.shape == (num_nodes, gcn_filters[-1]), out.shape
    assert bool(jnp.all(out >= 0.0))  # ReLU output is non-negative

    # Compare against the pure-JAX f32 reference (loose tol: bf16 matmuls).
    ref = _reference_forward(params, features, edges)
    err = float(jnp.max(jnp.abs(out - ref)))
    scale = float(jnp.max(jnp.abs(ref))) + 1e-6
    assert err <= 0.05 * scale + 0.05, (err, scale)

    print("KERNEL_OK")
</pallas_src>

<mosaic_0001>
module attributes {stable_mosaic.version = 11 : i64} {
  func.func @_fused_gcn_kernel(%arg0: i32, %arg1: memref<128x128xbf16, #tpu.memory_space<vmem>>, %arg2: memref<128x128xf32, #tpu.memory_space<vmem>>, %arg3: memref<1x128x128xbf16, #tpu.memory_space<vmem>>, %arg4: memref<1x1x128xf32, #tpu.memory_space<vmem>>, %arg5: memref<128x128xf32, #tpu.memory_space<vmem>>) attributes {dimension_semantics = [#tpu.dimension_semantics<arbitrary>], iteration_bounds = array<i64: 2>, scalar_prefetch = 0 : i64, scratch_operands = 0 : i64, tpu.core_type = #tpu.core_type<tc>, window_params = [{pipeline_mode = #tpu.pipeline_mode<synchronous>, transform_indices = @transform_0, window_bounds = array<i64: 128, 128>}, {pipeline_mode = #tpu.pipeline_mode<synchronous>, transform_indices = @transform_1, window_bounds = array<i64: 128, 128>}, {transform_indices = @transform_2, window_bounds = array<i64: 1, 128, 128>}, {transform_indices = @transform_3, window_bounds = array<i64: 1, 1, 128>}, {pipeline_mode = #tpu.pipeline_mode<synchronous>, transform_indices = @transform_4, window_bounds = array<i64: 128, 128>}]} {
    %c0_i32 = arith.constant 0 : i32
    %0 = arith.cmpi eq, %arg0, %c0_i32 : i32
    %1 = arith.extui %0 : i1 to i32
    %c0_i32_0 = arith.constant 0 : i32
    %2 = arith.cmpi ne, %1, %c0_i32_0 : i32
    scf.if %2 {
      %c0_14 = arith.constant 0 : index
      %c0_15 = arith.constant 0 : index
      %18 = vector.load %arg2[%c0_14, %c0_15] : memref<128x128xf32, #tpu.memory_space<vmem>>, vector<128x128xf32>
      %c0_16 = arith.constant 0 : index
      %c0_17 = arith.constant 0 : index
      %19 = vector.load %arg5[%c0_16, %c0_17] : memref<128x128xf32, #tpu.memory_space<vmem>>, vector<128x128xf32>
      tpu.vector_store %arg5[%c0_16, %c0_17], %18 {strides = array<i32>} : memref<128x128xf32, #tpu.memory_space<vmem>>, vector<128x128xf32>,
    } else {
    }
    %c0 = arith.constant 0 : index
    %c0_1 = arith.constant 0 : index
    %3 = vector.load %arg5[%c0, %c0_1] : memref<128x128xf32, #tpu.memory_space<vmem>>, vector<128x128xf32>
    %4 = arith.truncf %3 : vector<128x128xf32> to vector<128x128xbf16>
    %c0_2 = arith.constant 0 : index
    %c0_3 = arith.constant 0 : index
    %c0_4 = arith.constant 0 : index
    %5 = vector.load %arg3[%c0_2, %c0_3, %c0_4] : memref<1x128x128xbf16, #tpu.memory_space<vmem>>, vector<1x128x128xbf16>
    %6 = vector.shape_cast %5 : vector<1x128x128xbf16> to vector<128x128xbf16>
    %cst = arith.constant dense<0.000000e+00> : vector<128x128xf32>
    %7 = tpu.matmul %4, %6, %cst {dimension_numbers = #tpu.dot_dimension_numbers<[1], [0], [0], [1], [0, 0, 1, 1], [], []>} : vector<128x128xbf16>, vector<128x128xbf16>, vector<128x128xf32> -> vector<128x128xf32>
    %c0_5 = arith.constant 0 : index
    %c0_6 = arith.constant 0 : index
    %8 = vector.load %arg1[%c0_5, %c0_6] : memref<128x128xbf16, #tpu.memory_space<vmem>>, vector<128x128xbf16>
    %9 = arith.truncf %7 : vector<128x128xf32> to vector<128x128xbf16>
    %cst_7 = arith.constant dense<0.000000e+00> : vector<128x128xf32>
    %10 = tpu.matmul %8, %9, %cst_7 {dimension_numbers = #tpu.dot_dimension_numbers<[1], [0], [0], [1], [0, 0, 1, 1], [], []>} : vector<128x128xbf16>, vector<128x128xbf16>, vector<128x128xf32> -> vector<128x128xf32>
    %c0_8 = arith.constant 0 : index
    %c0_9 = arith.constant 0 : index
    %c0_10 = arith.constant 0 : index
    %11 = vector.load %arg4[%c0_8, %c0_9, %c0_10] : memref<1x1x128xf32, #tpu.memory_space<vmem>>, vector<1x1x128xf32>
    %12 = vector.shape_cast %11 : vector<1x1x128xf32> to vector<1x128xf32>
    %13 = vector.broadcast %12 : vector<1x128xf32> to vector<128x128xf32>
    %14 = arith.addf %10, %13 : vector<128x128xf32>
    %cst_11 = arith.constant 0.000000e+00 : f32
    %15 = vector.broadcast %cst_11 : f32 to vector<128x128xf32>
    %16 = arith.maximumf %14, %15 : vector<128x128xf32>
    %c0_12 = arith.constant 0 : index
    %c0_13 = arith.constant 0 : index
    %17 = vector.load %arg5[%c0_12, %c0_13] : memref<128x128xf32, #tpu.memory_space<vmem>>, vector<128x128xf32>
    tpu.vector_store %arg5[%c0_12, %c0_13], %16 {strides = array<i32>} : memref<128x128xf32, #tpu.memory_space<vmem>>, vector<128x128xf32>,
    return
  }
  func.func @transform_0(%arg0: i32) -> (i32, i32) {
    %c0_i32 = arith.constant 0 : i32
    %c0_i32_0 = arith.constant 0 : i32
    %c0_i32_1 = arith.constant 0 : i32
    return %c0_i32, %c0_i32_0 : i32, i32
  }
  func.func @transform_1(%arg0: i32) -> (i32, i32) {
    %c0_i32 = arith.constant 0 : i32
    %c0_i32_0 = arith.constant 0 : i32
    %c0_i32_1 = arith.constant 0 : i32
    return %c0_i32, %c0_i32_0 : i32, i32
  }
  func.func @transform_2(%arg0: i32) -> (i32, i32, i32) {
    %c0_i32 = arith.constant 0 : i32
    %c0_i32_0 = arith.constant 0 : i32
    %c0_i32_1 = arith.constant 0 : i32
    return %arg0, %c0_i32, %c0_i32_0 : i32, i32, i32
  }
  func.func @transform_3(%arg0: i32) -> (i32, i32, i32) {
    %c0_i32 = arith.constant 0 : i32
    %c0_i32_0 = arith.constant 0 : i32
    %c0_i32_1 = arith.constant 0 : i32
    return %arg0, %c0_i32, %c0_i32_0 : i32, i32, i32
  }
  func.func @transform_4(%arg0: i32) -> (i32, i32) {
    %c0_i32 = arith.constant 0 : i32
    %c0_i32_0 = arith.constant 0 : i32
    %c0_i32_1 = arith.constant 0 : i32
    return %c0_i32, %c0_i32_0 : i32, i32
  }
}

</mosaic_0001>

<llo_original>
// kernel: basic_gcn_layers_forward.1
$region0: #{basic_gcn_layers_forward.1}
  #allocation0 [shape = 'u32[]', space=smem, size = 0x4, offset = 0x4, fixed_abs, tag = 'smem constant byte address 0x4 - core index']
  #allocation1 [shape = 'u32[72,128]{1,0:T(1,128)}', space=vmem, size = 0x9000, scoped, tag = 'internal scratch']
  %s0 = inlined_call_operand.vmem [shape: bf16[128,128], index: 0, kind: input, shape index: {}]
  %s1 = inlined_call_operand.vmem [shape: f32[128,128], index: 1, kind: input, shape index: {}]
  %s2 = inlined_call_operand.vmem [shape: bf16[2,128,128], index: 2, kind: input, shape index: {}]
  %s3 = inlined_call_operand.vmem [shape: f32[2,1,128], index: 3, kind: input, shape index: {}]
  %s4 = inlined_call_operand.vmem [shape: f32[128,128], index: 4, kind: output, shape index: {}]
  %s5 = sld [smem:[#allocation0]]
  $region53: #{basic_gcn_layers_forward.1} parent=0
    _
  %s7 = ssub.s32 1, %s5
  %s8 = scalar_select 0, %s7, %s5
  loop: start=0, step=1, limit=4
  $region2: #{basic_gcn_layers_forward.1} parent=0 // loop_pre_header
    _
  $region3: #{basic_gcn_layers_forward.1} parent=0 // loop_header
    %s10 = sphi 0, %s14
    %p11 = scmp.ge.s32.totalorder %s10, 4
    %s18 = sphi 0, %s18
    %s20 = sphi 0, %s18
    %s21 = sphi 0, %s20
    %s35 = sphi 0, %s21
    %s39 = sphi 0, %s39
    %s41 = sphi 0, %s39
    %s42 = sphi 0, %s41
    %s56 = sphi 0, %s42
    %s62 = sphi 0, %s64
    %s65 = sphi 0, %s62
    %s66 = sphi 0, %s65
    %s82 = sphi 0, %s66
    %s88 = sphi 0, %s90
    %s91 = sphi 0, %s88
    %s92 = sphi 0, %s91
    %s108 = sphi 0, %s92
    %s112 = sphi 0, %s112
    %s114 = sphi 0, %s112
    %s115 = sphi 0, %s114
    %s129 = sphi 0, %s115
  $region4: #{basic_gcn_layers_forward.1} parent=0 // loop_header_branch
    %13 = sbr.rel (%p11) target = $region8
  $region5: #{basic_gcn_layers_forward.1} parent=0 // loop_body
    %s15 = ssub.s32 %s10, 1
    %s16 = ssub.s32 %s10, 2
    %s17 = sadd.s32 %s10, 1
    %s19 = sadd.s32 %s18, 1
    %p22 = scmp.eq.s32.totalorder %s10, 1
    %p23 = scmp.ne.s32.totalorder %s18, %s20
    %p24 = scmp.eq.s32.totalorder %s10, 0
    %p25 = por %p23, %p24
    %p26 = scmp.ne.s32.totalorder %s18, %s20
    %p27 = scmp.eq.s32.totalorder %s15, 1
    %p28 = por %p26, %p27
    %p29 = scmp.ne.s32.totalorder %s20, %s21
    %p30 = scmp.eq.s32.totalorder %s15, 0
    %p31 = por %p29, %p30
    %p32 = scmp.ne.s32.totalorder %s20, %s21
    %p33 = scmp.eq.s32.totalorder %s16, 1
    %p34 = por %p32, %p33
    %p36 = scmp.ne.s32.totalorder %s21, %s35
    %p37 = scmp.eq.s32.totalorder %s16, 0
    %p38 = por %p36, %p37
    %s40 = sadd.s32 %s39, 1
    %p43 = scmp.eq.s32.totalorder %s10, 1
    %p44 = scmp.ne.s32.totalorder %s39, %s41
    %p45 = scmp.eq.s32.totalorder %s10, 0
    %p46 = por %p44, %p45
    %p47 = scmp.ne.s32.totalorder %s39, %s41
    %p48 = scmp.eq.s32.totalorder %s15, 1
    %p49 = por %p47, %p48
    %p50 = scmp.ne.s32.totalorder %s41, %s42
    %p51 = scmp.eq.s32.totalorder %s15, 0
    %p52 = por %p50, %p51
    %p53 = scmp.ne.s32.totalorder %s41, %s42
    %p54 = scmp.eq.s32.totalorder %s16, 1
    %p55 = por %p53, %p54
    %p57 = scmp.ne.s32.totalorder %s42, %s56
    %p58 = scmp.eq.s32.totalorder %s16, 0
    %p59 = por %p57, %p58
    %s60 = ssub.s32 %s10, %s17
    %p61 = scmp.eq.s32.totalorder %s60, 0
    %s63 = sadd.s32 %s62, 1
    %s64 = scalar_select %p61, %s62, %s63
    %p67 = pneg %p61
    %p68 = scmp.eq.s32.totalorder %s10, 1
    %p69 = por %p67, %p68
    %p70 = scmp.ne.s32.totalorder %s62, %s65
    %p71 = scmp.eq.s32.totalorder %s10, 0
    %p72 = por %p70, %p71
    %p73 = scmp.ne.s32.totalorder %s62, %s65
    %p74 = scmp.eq.s32.totalorder %s15, 1
    %p75 = por %p73, %p74
    %p76 = scmp.ne.s32.totalorder %s65, %s66
    %p77 = scmp.eq.s32.totalorder %s15, 0
    %p78 = por %p76, %p77
    %p79 = scmp.ne.s32.totalorder %s65, %s66
    %p80 = scmp.eq.s32.totalorder %s16, 1
    %p81 = por %p79, %p80
    %p83 = scmp.ne.s32.totalorder %s66, %s82
    %p84 = scmp.eq.s32.totalorder %s16, 0
    %p85 = por %p83, %p84
    %s86 = ssub.s32 %s10, %s17
    %p87 = scmp.eq.s32.totalorder %s86, 0
    %s89 = sadd.s32 %s88, 1
    %s90 = scalar_select %p87, %s88, %s89
    %p93 = pneg %p87
    %p94 = scmp.eq.s32.totalorder %s10, 1
    %p95 = por %p93, %p94
    %p96 = scmp.ne.s32.totalorder %s88, %s91
    %p97 = scmp.eq.s32.totalorder %s10, 0
    %p98 = por %p96, %p97
    %p99 = scmp.ne.s32.totalorder %s88, %s91
    %p100 = scmp.eq.s32.totalorder %s15, 1
    %p101 = por %p99, %p100
    %p102 = scmp.ne.s32.totalorder %s91, %s92
    %p103 = scmp.eq.s32.totalorder %s15, 0
    %p104 = por %p102, %p103
    %p105 = scmp.ne.s32.totalorder %s91, %s92
    %p106 = scmp.eq.s32.totalorder %s16, 1
    %p107 = por %p105, %p106
    %p109 = scmp.ne.s32.totalorder %s92, %s108
    %p110 = scmp.eq.s32.totalorder %s16, 0
    %p111 = por %p109, %p110
    %s113 = sadd.s32 %s112, 1
    %p116 = scmp.eq.s32.totalorder %s10, 1
    %p117 = scmp.ne.s32.totalorder %s112, %s114
    %p118 = scmp.eq.s32.totalorder %s10, 0
    %p119 = por %p117, %p118
    %p120 = scmp.ne.s32.totalorder %s112, %s114
    %p121 = scmp.eq.s32.totalorder %s15, 1
    %p122 = por %p120, %p121
    %p123 = scmp.ne.s32.totalorder %s114, %s115
    %p124 = scmp.eq.s32.totalorder %s15, 0
    %p125 = por %p123, %p124
    %p126 = scmp.ne.s32.totalorder %s114, %s115
    %p127 = scmp.eq.s32.totalorder %s16, 1
    %p128 = por %p126, %p127
    %p130 = scmp.ne.s32.totalorder %s115, %s129
    %p131 = scmp.eq.s32.totalorder %s16, 0
    %p132 = por %p130, %p131
    %p133 = scmp.le.s32.totalorder 1, %s10
    %p134 = scmp.lt.s32.totalorder %s10, 3
    %p135 = pnand %p133, %p134
    %p136 = pneg %p135
    // Predicated region
    $region9: #{basic_gcn_layers_forward.1} parent=5 // pred_check
      _
    $region10: #{basic_gcn_layers_forward.1} parent=5 // pred_check_branch
      %138 = sbr.rel (%p135) target = $region12
    $region11: #{basic_gcn_layers_forward.1} parent=5 // pred_region
      %s139 = ssub.s32 %s10, 1
      // Predicated region
      $region13: #{basic_gcn_layers_forward.1} parent=11 // pred_check
        %p140 = pneg %p31
      $region14: #{basic_gcn_layers_forward.1} parent=11 // pred_check_branch
        %142 = sbr.rel (%p140) target = $region16
      $region15: #{basic_gcn_layers_forward.1} parent=11 // pred_region
        _
      $region16: #{basic_gcn_layers_forward.1} parent=11 // pred_fallthru
        _
      // Predicated region
      $region17: #{basic_gcn_layers_forward.1} parent=11 // pred_check
        %p143 = pneg %p52
      $region18: #{basic_gcn_layers_forward.1} parent=11 // pred_check_branch
        %145 = sbr.rel (%p143) target = $region20
      $region19: #{basic_gcn_layers_forward.1} parent=11 // pred_region
        _
      $region20: #{basic_gcn_layers_forward.1} parent=11 // pred_fallthru
        _
    $region12: #{basic_gcn_layers_forward.1} parent=5 // pred_fallthru
      _
    %p146 = scmp.lt.s32.totalorder %s10, 2
    // Predicated region
    $region21: #{basic_gcn_layers_forward.1} parent=5 // pred_check
      %p147 = pneg %p146
    $region22: #{basic_gcn_layers_forward.1} parent=5 // pred_check_branch
      %149 = sbr.rel (%p147) target = $region24
    $region23: #{basic_gcn_layers_forward.1} parent=5 // pred_region
      // Predicated region
      $region25: #{basic_gcn_layers_forward.1} parent=23 // pred_check
        %p150 = pneg %p72
      $region26: #{basic_gcn_layers_forward.1} parent=23 // pred_check_branch
        %152 = sbr.rel (%p150) target = $region28
      $region27: #{basic_gcn_layers_forward.1} parent=23 // pred_region
        %p153 = scmp.lt.s32.totalorder %s10, 1
        %s154 = scalar_select %p153, %s10, 1
        %s155 = smul.addr %s154, 16
        %s156 = smul.addr %s155, 4
        %s157 = scalar_lea.vmem %s2, %s156
      $region28: #{basic_gcn_layers_forward.1} parent=23 // pred_fallthru
        _
      // Predicated region
      $region29: #{basic_gcn_layers_forward.1} parent=23 // pred_check
        %p158 = pneg %p98
      $region30: #{basic_gcn_layers_forward.1} parent=23 // pred_check_branch
        %160 = sbr.rel (%p158) target = $region32
      $region31: #{basic_gcn_layers_forward.1} parent=23 // pred_region
        %p161 = scmp.lt.s32.totalorder %s10, 1
        %s162 = scalar_select %p161, %s10, 1
        %s163 = scalar_lea.vmem %s3, %s162
      $region32: #{basic_gcn_layers_forward.1} parent=23 // pred_fallthru
        _
    $region24: #{basic_gcn_layers_forward.1} parent=5 // pred_fallthru
      _
    %p164 = scmp.le.s32.totalorder 1, %s10
    %p165 = scmp.lt.s32.totalorder %s10, 3
    %p166 = pnand %p164, %p165
    %p167 = pneg %p166
    // Predicated region
    $region33: #{basic_gcn_layers_forward.1} parent=5 // pred_check
      _
    $region34: #{basic_gcn_layers_forward.1} parent=5 // pred_check_branch
      %169 = sbr.rel (%p166) target = $region36
    $region35: #{basic_gcn_layers_forward.1} parent=5 // pred_region
      %s170 = ssub.s32 %s10, 1
      %p171 = pneg %p31
      %p172 = pneg %p28
      %p173 = pneg %p52
      %p174 = pneg %p49
      %p175 = scmp.lt.s32.totalorder %s15, 1
      %s176 = scalar_select %p175, %s15, 1
      %s177 = smul.addr %s176, 16
      %s178 = smul.addr %s177, 4
      %s179 = scalar_lea.vmem %s2, %s178
      %p180 = pneg %p78
      %p181 = pneg %p75
      %p182 = scmp.lt.s32.totalorder %s15, 1
      %s183 = scalar_select %p182, %s15, 1
      %s184 = scalar_lea.vmem %s3, %s183
      %p185 = pneg %p104
      %p186 = pneg %p101
      %p187 = pneg %p125
      %p188 = pneg %p122
      %p189 = scmp.lt.s32.totalorder %s15, 1
      %s190 = scalar_select %p189, %s15, 1
      %s191 = smul.addr %s190, 16
      %s192 = smul.addr %s191, 4
      %s193 = scalar_lea.vmem %s2, %s192
      %p194 = scmp.lt.s32.totalorder %s15, 1
      %s195 = scalar_select %p194, %s15, 1
      %s196 = scalar_lea.vmem %s3, %s195
      %p197 = scmp.eq.s32.totalorder %s15, 0
      // Predicated region
      $region37: #{basic_gcn_layers_forward.1} parent=35 // pred_check
        %p198 = pneg %p197
      $region38: #{basic_gcn_layers_forward.1} parent=35 // pred_check_branch
        %200 = sbr.rel (%p198) target = $region40
      $region39: #{basic_gcn_layers_forward.1} parent=35 // pred_region
        %v201 = vld [vmem:[%s1] sm:$0xff]
        %v202 = vld [vmem:[%s1 + $0x8] sm:$0xff]
        %v203 = vld [vmem:[%s1 + $0x10] sm:$0xff]
        %v204 = vld [vmem:[%s1 + $0x18] sm:$0xff]
        %v205 = vld [vmem:[%s1 + $0x20] sm:$0xff]
        %v206 = vld [vmem:[%s1 + $0x28] sm:$0xff]
        %v207 = vld [vmem:[%s1 + $0x30] sm:$0xff]
        %v208 = vld [vmem:[%s1 + $0x38] sm:$0xff]
        %v209 = vld [vmem:[%s1 + $0x40] sm:$0xff]
        %v210 = vld [vmem:[%s1 + $0x48] sm:$0xff]
        %v211 = vld [vmem:[%s1 + $0x50] sm:$0xff]
        %v212 = vld [vmem:[%s1 + $0x58] sm:$0xff]
        %v213 = vld [vmem:[%s1 + $0x60] sm:$0xff]
        %v214 = vld [vmem:[%s1 + $0x68] sm:$0xff]
        %v215 = vld [vmem:[%s1 + $0x70] sm:$0xff]
        %v216 = vld [vmem:[%s1 + $0x78] sm:$0xff]
        %217 = vst [vmem:[%s4] sm:$0xff] %v201
        %218 = vst [vmem:[%s4 + $0x8] sm:$0xff] %v202
        %219 = vst [vmem:[%s4 + $0x10] sm:$0xff] %v203
        %220 = vst [vmem:[%s4 + $0x18] sm:$0xff] %v204
        %221 = vst [vmem:[%s4 + $0x20] sm:$0xff] %v205
        %222 = vst [vmem:[%s4 + $0x28] sm:$0xff] %v206
        %223 = vst [vmem:[%s4 + $0x30] sm:$0xff] %v207
        %224 = vst [vmem:[%s4 + $0x38] sm:$0xff] %v208
        %225 = vst [vmem:[%s4 + $0x40] sm:$0xff] %v209
        %226 = vst [vmem:[%s4 + $0x48] sm:$0xff] %v210
        %227 = vst [vmem:[%s4 + $0x50] sm:$0xff] %v211
        %228 = vst [vmem:[%s4 + $0x58] sm:$0xff] %v212
        %229 = vst [vmem:[%s4 + $0x60] sm:$0xff] %v213
        %230 = vst [vmem:[%s4 + $0x68] sm:$0xff] %v214
        %231 = vst [vmem:[%s4 + $0x70] sm:$0xff] %v215
        %232 = vst [vmem:[%s4 + $0x78] sm:$0xff] %v216
      $region40: #{basic_gcn_layers_forward.1} parent=35 // pred_fallthru
        _
      %v233 = vld [vmem:[%s4] sm:$0xff]
      %v234 = vld [vmem:[%s4 + $0x8] sm:$0xff]
      %v235 = vld [vmem:[%s4 + $0x10] sm:$0xff]
      %v236 = vld [vmem:[%s4 + $0x18] sm:$0xff]
      %v237 = vld [vmem:[%s4 + $0x20] sm:$0xff]
      %v238 = vld [vmem:[%s4 + $0x28] sm:$0xff]
      %v239 = vld [vmem:[%s4 + $0x30] sm:$0xff]
      %v240 = vld [vmem:[%s4 + $0x38] sm:$0xff]
      %v241 = vld [vmem:[%s4 + $0x40] sm:$0xff]
      %v242 = vld [vmem:[%s4 + $0x48] sm:$0xff]
      %v243 = vld [vmem:[%s4 + $0x50] sm:$0xff]
      %v244 = vld [vmem:[%s4 + $0x58] sm:$0xff]
      %v245 = vld [vmem:[%s4 + $0x60] sm:$0xff]
      %v246 = vld [vmem:[%s4 + $0x68] sm:$0xff]
      %v247 = vld [vmem:[%s4 + $0x70] sm:$0xff]
      %v248 = vld [vmem:[%s4 + $0x78] sm:$0xff]
      %v249 = vpack.c.bf16 %v234, %v233
      %v250 = vpack.c.bf16 %v236, %v235
      %v251 = vpack.c.bf16 %v238, %v237
      %v252 = vpack.c.bf16 %v240, %v239
      %v253 = vpack.c.bf16 %v242, %v241
      %v254 = vpack.c.bf16 %v244, %v243
      %v255 = vpack.c.bf16 %v246, %v245
      %v256 = vpack.c.bf16 %v248, %v247
      %v257 = vld [vmem:[%s193] sm:$0xf]
      %v258 = vld [vmem:[%s193 + $0x4] sm:$0xf]
      %v259 = vld [vmem:[%s193 + $0x8] sm:$0xf]
      %v260 = vld [vmem:[%s193 + $0xc] sm:$0xf]
      %v261 = vld [vmem:[%s193 + $0x10] sm:$0xf]
      %v262 = vld [vmem:[%s193 + $0x14] sm:$0xf]
      %v263 = vld [vmem:[%s193 + $0x18] sm:$0xf]
      %v264 = vld [vmem:[%s193 + $0x1c] sm:$0xf]
      %v265 = vld [vmem:[%s193 + $0x20] sm:$0xf]
      %v266 = vld [vmem:[%s193 + $0x24] sm:$0xf]
      %v267 = vld [vmem:[%s193 + $0x28] sm:$0xf]
      %v268 = vld [vmem:[%s193 + $0x2c] sm:$0xf]
      %v269 = vld [vmem:[%s193 + $0x30] sm:$0xf]
      %v270 = vld [vmem:[%s193 + $0x34] sm:$0xf]
      %v271 = vld [vmem:[%s193 + $0x38] sm:$0xf]
      %v272 = vld [vmem:[%s193 + $0x3c] sm:$0xf]
      %v289 = vunpack.c.l.b16 %v257
      %v290 = vunpack.c.l.b16 %v258
      %v291 = vunpack.c.l.b16 %v259
      %v292 = vunpack.c.l.b16 %v260
      %v293 = vunpack.c.l.b16 %v261
      %v294 = vunpack.c.l.b16 %v262
      %v295 = vunpack.c.l.b16 %v263
      %v296 = vunpack.c.l.b16 %v264
      %v297 = vunpack.c.l.b16 %v265
      %v298 = vunpack.c.l.b16 %v266
      %v299 = vunpack.c.l.b16 %v267
      %v300 = vunpack.c.l.b16 %v268
      %v301 = vunpack.c.l.b16 %v269
      %v302 = vunpack.c.l.b16 %v270
      %v303 = vunpack.c.l.b16 %v271
      %v304 = vunpack.c.l.b16 %v272
      %v305 = vpack.c.b16 %v290, %v289
      %v306 = vpack.c.b16 %v292, %v291
      %v307 = vpack.c.b16 %v294, %v293
      %v308 = vpack.c.b16 %v296, %v295
      %v309 = vpack.c.b16 %v298, %v297
      %v310 = vpack.c.b16 %v300, %v299
      %v311 = vpack.c.b16 %v302, %v301
      %v312 = vpack.c.b16 %v304, %v303
      %321 = vmatpush.bf16.msra.mxu0 %v312
      %322 = vmatpush.bf16.msra.mxu0 %v311
      %323 = vmatpush.bf16.msra.mxu0 %v310
      %324 = vmatpush.bf16.msra.mxu0 %v309
      %325 = vmatpush.bf16.msra.mxu0 %v308
      %326 = vmatpush.bf16.msra.mxu0 %v307
      %327 = vmatpush.bf16.msra.mxu0 %v306
      %328 = vmatpush.bf16.msra.mxu0 %v305
      %329 = vmatmul.bf16.gmra.mxu0 %v249
      %v330 = vpop.f32.mrf.mxu0
      %v331 = vadd.f32 0.0, %v330
      %v332 = vpop.f32.mrf.mxu0
      %v333 = vadd.f32 0.0, %v332
      %334 = vmatmul.bf16.gmra.mxu0 %v250
      %v335 = vpop.f32.mrf.mxu0
      %v336 = vadd.f32 0.0, %v335
      %v337 = vpop.f32.mrf.mxu0
      %v338 = vadd.f32 0.0, %v337
      %339 = vmatmul.bf16.gmra.mxu0 %v251
      %v340 = vpop.f32.mrf.mxu0
      %v341 = vadd.f32 0.0, %v340
      %v342 = vpop.f32.mrf.mxu0
      %v343 = vadd.f32 0.0, %v342
      %344 = vmatmul.bf16.gmra.mxu0 %v252
      %v345 = vpop.f32.mrf.mxu0
      %v346 = vadd.f32 0.0, %v345
      %v347 = vpop.f32.mrf.mxu0
      %v348 = vadd.f32 0.0, %v347
      %349 = vmatmul.bf16.gmra.mxu0 %v253
      %v350 = vpop.f32.mrf.mxu0
      %v351 = vadd.f32 0.0, %v350
      %v352 = vpop.f32.mrf.mxu0
      %v353 = vadd.f32 0.0, %v352
      %354 = vmatmul.bf16.gmra.mxu0 %v254
      %v355 = vpop.f32.mrf.mxu0
      %v356 = vadd.f32 0.0, %v355
      %v357 = vpop.f32.mrf.mxu0
      %v358 = vadd.f32 0.0, %v357
      %359 = vmatmul.bf16.gmra.mxu0 %v255
      %v360 = vpop.f32.mrf.mxu0
      %v361 = vadd.f32 0.0, %v360
      %v362 = vpop.f32.mrf.mxu0
      %v363 = vadd.f32 0.0, %v362
      %364 = vmatmul.bf16.gmra.mxu0 %v256
      %v365 = vpop.f32.mrf.mxu0
      %v366 = vadd.f32 0.0, %v365
      %v367 = vpop.f32.mrf.mxu0
      %v368 = vadd.f32 0.0, %v367
      %369 = vdwg.mxu0
      %v370 = vld [vmem:[%s0] sm:$0xf]
      %v371 = vld [vmem:[%s0 + $0x4] sm:$0xf]
      %v372 = vld [vmem:[%s0 + $0x8] sm:$0xf]
      %v373 = vld [vmem:[%s0 + $0xc] sm:$0xf]
      %v374 = vld [vmem:[%s0 + $0x10] sm:$0xf]
      %v375 = vld [vmem:[%s0 + $0x14] sm:$0xf]
      %v376 = vld [vmem:[%s0 + $0x18] sm:$0xf]
      %v377 = vld [vmem:[%s0 + $0x1c] sm:$0xf]
      %v378 = vld [vmem:[%s0 + $0x20] sm:$0xf]
      %v379 = vld [vmem:[%s0 + $0x24] sm:$0xf]
      %v380 = vld [vmem:[%s0 + $0x28] sm:$0xf]
      %v381 = vld [vmem:[%s0 + $0x2c] sm:$0xf]
      %v382 = vld [vmem:[%s0 + $0x30] sm:$0xf]
      %v383 = vld [vmem:[%s0 + $0x34] sm:$0xf]
      %v384 = vld [vmem:[%s0 + $0x38] sm:$0xf]
      %v385 = vld [vmem:[%s0 + $0x3c] sm:$0xf]
      %v386 = vpack.c.bf16 %v333, %v331
      %v387 = vpack.c.bf16 %v338, %v336
      %v388 = vpack.c.bf16 %v343, %v341
      %v389 = vpack.c.bf16 %v348, %v346
      %v390 = vpack.c.bf16 %v353, %v351
      %v391 = vpack.c.bf16 %v358, %v356
      %v392 = vpack.c.bf16 %v363, %v361
      %v393 = vpack.c.bf16 %v368, %v366
      %v394 = vld [vmem:[%s196] sm:$0x1]
      %v396 = vperm.slane %v394, 0
      %v414 = vunpack.c.l.b16 %v370
      %v415 = vunpack.c.l.b16 %v371
      %v416 = vunpack.c.l.b16 %v372
      %v417 = vunpack.c.l.b16 %v373
      %v418 = vunpack.c.l.b16 %v374
      %v419 = vunpack.c.l.b16 %v375
      %v420 = vunpack.c.l.b16 %v376
      %v421 = vunpack.c.l.b16 %v377
      %v422 = vunpack.c.l.b16 %v378
      %v423 = vunpack.c.l.b16 %v379
      %v424 = vunpack.c.l.b16 %v380
      %v425 = vunpack.c.l.b16 %v381
      %v426 = vunpack.c.l.b16 %v382
      %v427 = vunpack.c.l.b16 %v383
      %v428 = vunpack.c.l.b16 %v384
      %v429 = vunpack.c.l.b16 %v385
      %v430 = vpack.c.b16 %v415, %v414
      %v431 = vpack.c.b16 %v417, %v416
      %v432 = vpack.c.b16 %v419, %v418
      %v433 = vpack.c.b16 %v421, %v420
      %v434 = vpack.c.b16 %v423, %v422
      %v435 = vpack.c.b16 %v425, %v424
      %v436 = vpack.c.b16 %v427, %v426
      %v437 = vpack.c.b16 %v429, %v428
      %446 = vmatpush.bf16.msra.mxu0 %v393
      %447 = vmatpush.bf16.msra.mxu0 %v392
      %448 = vmatpush.bf16.msra.mxu0 %v391
      %449 = vmatpush.bf16.msra.mxu0 %v390
      %450 = vmatpush.bf16.msra.mxu0 %v389
      %451 = vmatpush.bf16.msra.mxu0 %v388
      %452 = vmatpush.bf16.msra.mxu0 %v387
      %453 = vmatpush.bf16.msra.mxu0 %v386
      %454 = vmatmul.bf16.gmra.mxu0 %v430
      %v455 = vpop.f32.mrf.mxu0
      %v456 = vadd.f32 %v396, %v455
      %v457 = vpop.f32.mrf.mxu0
      %v458 = vadd.f32 %v396, %v457
      %459 = vmatmul.bf16.gmra.mxu0 %v431
      %v460 = vpop.f32.mrf.mxu0
      %v461 = vadd.f32 %v396, %v460
      %v462 = vpop.f32.mrf.mxu0
      %v463 = vadd.f32 %v396, %v462
      %464 = vmatmul.bf16.gmra.mxu0 %v432
      %v465 = vpop.f32.mrf.mxu0
      %v466 = vadd.f32 %v396, %v465
      %v467 = vpop.f32.mrf.mxu0
      %v468 = vadd.f32 %v396, %v467
      %469 = vmatmul.bf16.gmra.mxu0 %v433
      %v470 = vpop.f32.mrf.mxu0
      %v471 = vadd.f32 %v396, %v470
      %v472 = vpop.f32.mrf.mxu0
      %v473 = vadd.f32 %v396, %v472
      %474 = vmatmul.bf16.gmra.mxu0 %v434
      %v475 = vpop.f32.mrf.mxu0
      %v476 = vadd.f32 %v396, %v475
      %v477 = vpop.f32.mrf.mxu0
      %v478 = vadd.f32 %v396, %v477
      %479 = vmatmul.bf16.gmra.mxu0 %v435
      %v480 = vpop.f32.mrf.mxu0
      %v481 = vadd.f32 %v396, %v480
      %v482 = vpop.f32.mrf.mxu0
      %v483 = vadd.f32 %v396, %v482
      %484 = vmatmul.bf16.gmra.mxu0 %v436
      %v485 = vpop.f32.mrf.mxu0
      %v486 = vadd.f32 %v396, %v485
      %v487 = vpop.f32.mrf.mxu0
      %v488 = vadd.f32 %v396, %v487
      %489 = vmatmul.bf16.gmra.mxu0 %v437
      %v490 = vpop.f32.mrf.mxu0
      %v491 = vadd.f32 %v396, %v490
      %v492 = vpop.f32.mrf.mxu0
      %v493 = vadd.f32 %v396, %v492
      %494 = vdwg.mxu0
      %v495 = vmax.f32 %v456, 0.0
      %v496 = vmax.f32 %v458, 0.0
      %v497 = vmax.f32 %v461, 0.0
      %v498 = vmax.f32 %v463, 0.0
      %v499 = vmax.f32 %v466, 0.0
      %v500 = vmax.f32 %v468, 0.0
      %v501 = vmax.f32 %v471, 0.0
      %v502 = vmax.f32 %v473, 0.0
      %v503 = vmax.f32 %v476, 0.0
      %v504 = vmax.f32 %v478, 0.0
      %v505 = vmax.f32 %v481, 0.0
      %v506 = vmax.f32 %v483, 0.0
      %v507 = vmax.f32 %v486, 0.0
      %v508 = vmax.f32 %v488, 0.0
      %v509 = vmax.f32 %v491, 0.0
      %v510 = vmax.f32 %v493, 0.0
      %511 = vst [vmem:[%s4] sm:$0xff] %v495
      %512 = vst [vmem:[%s4 + $0x8] sm:$0xff] %v496
      %513 = vst [vmem:[%s4 + $0x10] sm:$0xff] %v497
      %514 = vst [vmem:[%s4 + $0x18] sm:$0xff] %v498
      %515 = vst [vmem:[%s4 + $0x20] sm:$0xff] %v499
      %516 = vst [vmem:[%s4 + $0x28] sm:$0xff] %v500
      %517 = vst [vmem:[%s4 + $0x30] sm:$0xff] %v501
      %518 = vst [vmem:[%s4 + $0x38] sm:$0xff] %v502
      %519 = vst [vmem:[%s4 + $0x40] sm:$0xff] %v503
      %520 = vst [vmem:[%s4 + $0x48] sm:$0xff] %v504
      %521 = vst [vmem:[%s4 + $0x50] sm:$0xff] %v505
      %522 = vst [vmem:[%s4 + $0x58] sm:$0xff] %v506
      %523 = vst [vmem:[%s4 + $0x60] sm:$0xff] %v507
      %524 = vst [vmem:[%s4 + $0x68] sm:$0xff] %v508
      %525 = vst [vmem:[%s4 + $0x70] sm:$0xff] %v509
      %526 = vst [vmem:[%s4 + $0x78] sm:$0xff] %v510
      // Predicated region
      $region41: #{basic_gcn_layers_forward.1} parent=35 // pred_check
        %p527 = pneg %p122
      $region42: #{basic_gcn_layers_forward.1} parent=35 // pred_check_branch
        %529 = sbr.rel (%p527) target = $region44
      $region43: #{basic_gcn_layers_forward.1} parent=35 // pred_region
        _
      $region44: #{basic_gcn_layers_forward.1} parent=35 // pred_fallthru
        _
      // Predicated region
      $region45: #{basic_gcn_layers_forward.1} parent=35 // pred_check
        %p530 = pneg %p122
      $region46: #{basic_gcn_layers_forward.1} parent=35 // pred_check_branch
        %532 = sbr.rel (%p530) target = $region48
      $region47: #{basic_gcn_layers_forward.1} parent=35 // pred_region
        _
      $region48: #{basic_gcn_layers_forward.1} parent=35 // pred_fallthru
        _
    $region36: #{basic_gcn_layers_forward.1} parent=5 // pred_fallthru
      _
    %p533 = scmp.le.s32.totalorder 2, %s10
    // Predicated region
    $region49: #{basic_gcn_layers_forward.1} parent=5 // pred_check
      %p534 = pneg %p533
    $region50: #{basic_gcn_layers_forward.1} parent=5 // pred_check_branch
      %536 = sbr.rel (%p534) target = $region52
    $region51: #{basic_gcn_layers_forward.1} parent=5 // pred_region
      %s537 = ssub.s32 %s10, 2
    $region52: #{basic_gcn_layers_forward.1} parent=5 // pred_fallthru
      _
  $region6: #{basic_gcn_layers_forward.1} parent=0 // loop_footer
    %s14 = sadd.s32 1, %s10
  $region7: #{basic_gcn_layers_forward.1} parent=0 // loop_footer_branch
    %9 = sbr.rel target = $region3
  $region8: #{basic_gcn_layers_forward.1} parent=0 // loop_exit
    _

</llo_original>
